<compile_context>
chip_gen: v6e
topology: v6e:2x2x1
jax: 0.10.0
libtpu: 0.0.40
codegen_flags: <defaults>
</compile_context>

<pallas_src>
import functools
import math

import jax
import jax.numpy as jnp
from jax.experimental import pallas as pl
from jax.experimental.pallas import tpu as pltpu


# ---------------------------------------------------------------------------
# Kernel
# ---------------------------------------------------------------------------
def _compute_shifted(x, m, shifted_ref, *, shifts, fps, seq_len, dim_padded,
                     lane_aligned, out_dtype):
    """Build the token-shifted tile and write it into `shifted_ref`.

    x: (M, Dp) tile with M = TB * seq_len rows (TB batches stacked along rows).
    m: (M, 1) float mask (1.0 = keep).
    """
    M = x.shape[0]

    row = jax.lax.broadcasted_iota(jnp.int32, (M, 1), 0)
    if (seq_len & (seq_len - 1)) == 0:
        srow = row & (seq_len - 1)           # row index within its batch (pow-2)
    else:
        srow = row % seq_len
    keep = m != 0.0

    if lane_aligned:
        # Segments are 128-lane aligned: roll only the lanes owned by each
        # nonzero-shift segment, store with static lane-aligned slices.
        shifted_ref[...] = x.astype(out_dtype)      # zero-shift segs + rest
        for j, amt in enumerate(shifts):
            if amt == 0:
                continue
            lo, hi = j * fps, (j + 1) * fps
            seg = jnp.where(keep, x[:, lo:hi], 0.0)          # masked_fill(~mask, 0)
            rolled = pltpu.roll(seg, shift=amt % M, axis=0)  # XLU sublane roll
            if amt > 0:
                valid = srow >= amt
            else:
                valid = srow < (seq_len + amt)
            shifted_ref[:, lo:hi] = jnp.where(valid, rolled, 0.0).astype(out_dtype)
    else:
        # Non-aligned segment width: one roll of the full tile per *distinct*
        # nonzero shift, blended into place with lane-index selects.
        groups = {}
        for j, amt in enumerate(shifts):
            if amt != 0:
                groups.setdefault(int(amt), []).append(j)

        x_masked = jnp.where(keep, x, 0.0)           # computed once, reused
        lane = jax.lax.broadcasted_iota(jnp.int32, (1, dim_padded), 1)
        shifted = x
        for amt, seg_ids in sorted(groups.items()):
            # Rows that wrapped (incl. rows crossing a batch boundary inside the
            # flattened block) are exactly the ones zeroed by `valid` below.
            rolled = pltpu.roll(x_masked, shift=amt % M, axis=0)
            if amt > 0:
                valid = srow >= amt
            else:
                valid = srow < (seq_len + amt)
            rolled = jnp.where(valid, rolled, 0.0)
            lane_sel = None
            for j in seg_ids:
                sel = (lane >= j * fps) & (lane < (j + 1) * fps)
                lane_sel = sel if lane_sel is None else (lane_sel | sel)
            shifted = jnp.where(lane_sel, rolled, shifted)
        # Lanes >= n_seg*fps ("rest" + D padding) are never selected -> pass through.
        shifted_ref[...] = shifted.astype(out_dtype)


def _preshift_kernel(x_ref, m_ref, w_ref, b_ref, o_ref, *scratch,
                     shifts, fps, seq_len, dim_padded, lane_aligned,
                     has_shift, compute_dtype):
    """x_ref: (M, Dp), m_ref: (M, 1), w_ref: (Dp, TN), b_ref: (1, TN),
    o_ref: (M, TN), scratch[0] (if present): (M, Dp) cached shifted tile."""
    if has_shift:
        shifted_ref = scratch[0]

        # The shifted tile only depends on the batch block (grid axis 0): cache
        # it and rebuild only once per batch block (weight-N axis is "arbitrary"
        # so j == 0 is always visited first for each i).
        @pl.when(pl.program_id(1) == 0)
        def _():
            _compute_shifted(x_ref[...], m_ref[...], shifted_ref,
                             shifts=shifts, fps=fps, seq_len=seq_len,
                             dim_padded=dim_padded, lane_aligned=lane_aligned,
                             out_dtype=compute_dtype)

        shifted = shifted_ref[...]
    else:
        shifted = x_ref[...].astype(compute_dtype)

    # fn(x): Linear(D, D) on the MXU, M = TB*S rows per dot, f32 accumulation.
    out = jnp.dot(shifted, w_ref[...], preferred_element_type=jnp.float32)
    out = out + b_ref[...]
    o_ref[...] = out.astype(o_ref.dtype)


# ---------------------------------------------------------------------------
# Tiling heuristics (byte-budgeted, chip-aware)
# ---------------------------------------------------------------------------
def _round_up(x, m):
    return ((x + m - 1) // m) * m


def _pick_tn(dp, w_bytes, max_weight_bytes=4 << 20):
    """Largest 128-multiple divisor of dp whose (dp, tn) weight tile fits."""
    if dp * dp * w_bytes <= max_weight_bytes:
        return dp
    best = 128
    tn = 128
    while tn < dp:
        if dp % tn == 0 and dp * tn * w_bytes <= max_weight_bytes:
            best = tn
        tn += 128
    return best


def _step_vmem_bytes(m_rows, dp, tn, x_bytes, w_bytes, c_bytes):
    """Rough per-step VMEM residency for the chosen tiling."""
    blocks = 2 * (m_rows * dp * x_bytes        # x block (double-buffered)
                  + m_rows * 4                 # mask block
                  + m_rows * tn * x_bytes)     # out block
    weights = 2 * (dp * tn * w_bytes + tn * 4)
    scratch = m_rows * dp * c_bytes            # cached shifted tile
    temps = 3 * m_rows * dp * 4                # masked / rolled / blend f32 temps
    return blocks + weights + scratch + temps


def _pick_tb(batch, seq, dp, tn, x_bytes, w_bytes, c_bytes, vmem_budget,
             target_rows):
    """Batches per grid step: byte-budgeted, sublane-aligned; wrapper pads B so
    there is no TB=1 (M=S) MXU-utilization cliff for awkward batch sizes."""
    factor = 8 // math.gcd(seq, 8)             # TB*seq must be a sublane multiple
    tb = max(1, target_rows // max(seq, 1))
    tb = min(tb, batch)
    tb = max(_round_up(tb, factor), factor)
    while tb > factor and _step_vmem_bytes(tb * seq, dp, tn, x_bytes, w_bytes,
                                           c_bytes) > vmem_budget:
        tb -= factor
    return tb


# ---------------------------------------------------------------------------
# Wrapper
# ---------------------------------------------------------------------------
def preshift_tokens(x, mask, w, b, shifts, *, matmul_dtype=None,
                    target_rows=512):
    """PreShiftTokens(shifts, fn=Linear(D, D)) forward.

    x: (B, S, D), mask: (B, S) bool (True = keep), w: (D, D), b: (D,).
    matmul_dtype: optional (e.g. jnp.bfloat16) to run only the GEMM in bf16.
    """
    B, S, D = x.shape
    n_seg = len(shifts)
    assert n_seg > 0
    shifts = tuple(int(a) for a in shifts)
    fps = D // n_seg
    for amt in shifts:
        assert abs(amt) < S, "shift magnitude must be < sequence length"
    has_shift = any(a != 0 for a in shifts)
    lane_aligned = fps > 0 and (fps % 128 == 0)

    compute_dtype = jnp.dtype(matmul_dtype) if matmul_dtype is not None else x.dtype

    # Pad the feature dim to a lane multiple so TN tiling never has a cliff.
    Dp = max(_round_up(D, 128), 128)

    # --- chip-aware VMEM budget -------------------------------------------
    try:
        info = pltpu.get_tpu_info()
        vmem_cap = int(getattr(info, "vmem_capacity_bytes", 64 << 20))
    except Exception:
        vmem_cap = 64 << 20                     # conservative (v7x per-core VMEM)
    vmem_budget = int(vmem_cap * 0.8)

    x_bytes = x.dtype.itemsize
    c_bytes = jnp.dtype(compute_dtype).itemsize
    w_bytes = c_bytes

    if compute_dtype == jnp.bfloat16:
        # bf16 MXU is ~4x faster -> need more rows per weight tile to hide the
        # per-step weight DMA.
        target_rows = max(target_rows, 1024)

    TN = _pick_tn(Dp, w_bytes)
    TB = _pick_tb(B, S, Dp, TN, x_bytes, w_bytes, c_bytes, vmem_budget,
                  target_rows)

    # Pad batch so TB always divides it; padded batches are masked and sliced off.
    Bp = _round_up(B, TB)
    nb = Bp // TB
    nn = Dp // TN
    M = TB * S

    # --- operand padding / reshaping --------------------------------------
    xp, mp = x, mask
    if Bp != B:
        xp = jnp.pad(xp, ((0, Bp - B), (0, 0), (0, 0)))
        mp = jnp.pad(mp, ((0, Bp - B), (0, 0)))
    if Dp != D:
        xp = jnp.pad(xp, ((0, 0), (0, 0), (0, Dp - D)))

    wp = w.astype(compute_dtype)
    bp = b.astype(jnp.float32)
    if Dp != D:
        wp = jnp.pad(wp, ((0, Dp - D), (0, Dp - D)))
        bp = jnp.pad(bp, ((0, Dp - D),))

    x2 = xp.reshape(Bp * S, Dp)
    m2 = mp.astype(jnp.float32).reshape(Bp * S, 1)
    b2 = bp.reshape(1, Dp)

    kernel = functools.partial(
        _preshift_kernel, shifts=shifts, fps=fps, seq_len=S, dim_padded=Dp,
        lane_aligned=lane_aligned, has_shift=has_shift,
        compute_dtype=compute_dtype)

    scratch_shapes = []
    if has_shift:
        scratch_shapes.append(pltpu.VMEM((M, Dp), compute_dtype))

    vmem_est = _step_vmem_bytes(M, Dp, TN, x_bytes, w_bytes, c_bytes)
    vmem_limit = int(min(max(vmem_est, 32 << 20), vmem_budget))

    cost = pl.CostEstimate(
        flops=2 * Bp * S * Dp * Dp,
        transcendentals=0,
        bytes_accessed=(x2.nbytes + m2.nbytes + nb * wp.nbytes + b2.nbytes
                        + Bp * S * Dp * x_bytes))

    # TODO(synk): for D so large that even the minimum TB's (M, Dp) temporaries
    # exceed v7x's 64 MiB, add a K (contraction) grid axis with an (M, TN) f32
    # accumulator scratch instead of shrinking TB further.
    out2 = pl.pallas_call(
        kernel,
        out_shape=jax.ShapeDtypeStruct((Bp * S, Dp), x.dtype),
        grid_spec=pltpu.PrefetchScalarGridSpec(
            num_scalar_prefetch=0,
            grid=(nb, nn),
            in_specs=[
                pl.BlockSpec((M, Dp), lambda i, j: (i, 0)),
                pl.BlockSpec((M, 1), lambda i, j: (i, 0)),
                # TODO(synk): pipeline_mode=pl.Buffered(3) on the weight input if
                # profiling shows exposed weight DMA at large Dp / TN.
                pl.BlockSpec((Dp, TN), lambda i, j: (0, j)),
                pl.BlockSpec((1, TN), lambda i, j: (0, j)),
            ],
            out_specs=pl.BlockSpec((M, TN), lambda i, j: (i, j)),
            scratch_shapes=scratch_shapes,
        ),
        compiler_params=pltpu.CompilerParams(
            # The weight-N axis must iterate sequentially per batch block so the
            # cached shifted tile stays valid -> "arbitrary"; batch axis stays
            # "parallel" (megacore). Keeping i outer / j inner is also what the
            # scratch cache requires, so we do not swap the loop order.
            dimension_semantics=("parallel", "arbitrary"),
            vmem_limit_bytes=vmem_limit),
        cost_estimate=cost,
    )(x2, m2, wp, b2)

    out = out2.reshape(Bp, S, Dp)
    if Bp != B:
        out = out[:B]
    if Dp != D:
        out = out[..., :D]
    return out


# ---------------------------------------------------------------------------
# Pure-JAX reference matching the PyTorch forward
# ---------------------------------------------------------------------------
def preshift_tokens_ref(x, mask, w, b, shifts):
    B, S, D = x.shape
    n_seg = len(shifts)
    fps = D // n_seg
    segs = []
    for j, amt in enumerate(shifts):
        seg = x[:, :, j * fps:(j + 1) * fps]
        if amt != 0:
            seg = jnp.where(mask[..., None], seg, 0.0)
            if amt > 0:
                seg = jnp.pad(seg, ((0, 0), (amt, 0), (0, 0)))[:, :S, :]
            else:
                seg = jnp.pad(seg, ((0, 0), (0, -amt), (0, 0)))[:, -amt:, :]
        segs.append(seg)
    if n_seg * fps < D:
        segs.append(x[:, :, n_seg * fps:])
    shifted = jnp.concatenate(segs, axis=-1)
    return shifted @ w + b


if __name__ == "__main__":
    key = jax.random.PRNGKey(0)

    def make_case(k, B, S, D):
        kx, km, kw, kb = jax.random.split(k, 4)
        x = jax.random.normal(kx, (B, S, D), dtype=jnp.float32)
        mask = jax.random.uniform(km, (B, S)) > 0.2          # bool mask
        w = jax.random.normal(kw, (D, D), dtype=jnp.float32) * 0.02
        b = jax.random.normal(kb, (D,), dtype=jnp.float32) * 0.01
        return x, mask, w, b

    k1, k2 = jax.random.split(key, 2)

    # 1) Non-lane-aligned segments (fps = 32), f32 MXU path.
    x, mask, w, b = make_case(k1, 2, 16, 128)
    shifts = (0, 1, -1, 2)
    out = jax.block_until_ready(preshift_tokens(x, mask, w, b, shifts))
    ref = preshift_tokens_ref(x, mask, w, b, shifts)
    assert out.shape == ref.shape
    assert jnp.allclose(out, ref, atol=1e-5, rtol=1e-5)

    # 1b) Same case, optional bf16 GEMM path (shift/mask stays f32).
    out_bf = jax.block_until_ready(
        preshift_tokens(x, mask, w, b, shifts, matmul_dtype=jnp.bfloat16))
    assert jnp.allclose(out_bf, ref, atol=1e-1, rtol=1e-1)

    # 2) Lane-aligned segments (fps = 128) + batch padding (B=5, TB=2 -> Bp=6).
    x, mask, w, b = make_case(k2, 5, 16, 256)
    shifts = (1, -2)
    out = jax.block_until_ready(
        preshift_tokens(x, mask, w, b, shifts, target_rows=32))
    ref = preshift_tokens_ref(x, mask, w, b, shifts)
    assert out.shape == ref.shape
    assert jnp.allclose(out, ref, atol=1e-5, rtol=1e-5)

    print("KERNEL_OK")
</pallas_src>

<mosaic_0001>
module attributes {stable_mosaic.version = 11 : i64} {
  func.func @_preshift_kernel(%arg0: i32, %arg1: i32, %arg2: memref<32x128xf32, #tpu.memory_space<vmem>>, %arg3: memref<32x1xf32, #tpu.memory_space<vmem>>, %arg4: memref<128x128xf32, #tpu.memory_space<vmem>>, %arg5: memref<1x128xf32, #tpu.memory_space<vmem>>, %arg6: memref<32x128xf32, #tpu.memory_space<vmem>>, %arg7: memref<32x128xf32, #tpu.memory_space<vmem>>) attributes {dimension_semantics = [#tpu.dimension_semantics<parallel>, #tpu.dimension_semantics<arbitrary>], iteration_bounds = array<i64: 1, 1>, scalar_prefetch = 0 : i64, scratch_operands = 1 : i64, tpu.core_type = #tpu.core_type<tc>, window_params = [{transform_indices = @transform_0, window_bounds = array<i64: 32, 128>}, {transform_indices = @transform_1, window_bounds = array<i64: 32, 1>}, {transform_indices = @transform_2, window_bounds = array<i64: 128, 128>}, {transform_indices = @transform_3, window_bounds = array<i64: 1, 128>}, {transform_indices = @transform_4, window_bounds = array<i64: 32, 128>}]} {
    %c0_i32 = arith.constant 0 : i32
    %0 = arith.cmpi eq, %arg1, %c0_i32 : i32
    %1 = arith.extui %0 : i1 to i32
    %c0_i32_0 = arith.constant 0 : i32
    %2 = arith.cmpi ne, %1, %c0_i32_0 : i32
    scf.if %2 {
      %c0_8 = arith.constant 0 : index
      %c0_9 = arith.constant 0 : index
      %10 = vector.load %arg2[%c0_8, %c0_9] : memref<32x128xf32, #tpu.memory_space<vmem>>, vector<32x128xf32>
      %c0_10 = arith.constant 0 : index
      %c0_11 = arith.constant 0 : index
      %11 = vector.load %arg3[%c0_10, %c0_11] : memref<32x1xf32, #tpu.memory_space<vmem>>, vector<32x1xf32>
      %12 = tpu.iota {dimensions = array<i32: 0>} : vector<32x1xi32>
      %c15_i32 = arith.constant 15 : i32
      %13 = vector.broadcast %c15_i32 : i32 to vector<32x1xi32>
      %14 = arith.andi %12, %13 : vector<32x1xi32>
      %cst_12 = arith.constant 0.000000e+00 : f32
      %15 = vector.broadcast %cst_12 : f32 to vector<32x1xf32>
      %16 = arith.cmpf one, %11, %15 : vector<32x1xf32>
      %cst_13 = arith.constant 0.000000e+00 : f32
      %17 = vector.shape_cast %16 : vector<32x1xi1> to vector<32x1xi1>
      %18 = vector.broadcast %17 : vector<32x1xi1> to vector<32x128xi1>
      %19 = vector.broadcast %cst_13 : f32 to vector<32x128xf32>
      %20 = arith.select %18, %10, %19 : vector<32x128xi1>, vector<32x128xf32>
      %21 = tpu.iota {dimensions = array<i32: 1>} : vector<1x128xi32>
      %c31_i32 = arith.constant 31 : i32
      %22 = tpu.dynamic_rotate %20 by %c31_i32 dim 0 : vector<32x128xf32>, i32 -> vector<32x128xf32>
      %c15_i32_14 = arith.constant 15 : i32
      %23 = vector.broadcast %c15_i32_14 : i32 to vector<32x1xi32>
      %24 = arith.cmpi slt, %14, %23 : vector<32x1xi32>
      %cst_15 = arith.constant 0.000000e+00 : f32
      %25 = vector.shape_cast %24 : vector<32x1xi1> to vector<32x1xi1>
      %26 = vector.broadcast %25 : vector<32x1xi1> to vector<32x128xi1>
      %27 = vector.broadcast %cst_15 : f32 to vector<32x128xf32>
      %28 = arith.select %26, %22, %27 : vector<32x128xi1>, vector<32x128xf32>
      %c64_i32 = arith.constant 64 : i32
      %29 = vector.broadcast %c64_i32 : i32 to vector<1x128xi32>
      %30 = arith.cmpi sge, %21, %29 : vector<1x128xi32>
      %c96_i32 = arith.constant 96 : i32
      %31 = vector.broadcast %c96_i32 : i32 to vector<1x128xi32>
      %32 = arith.cmpi slt, %21, %31 : vector<1x128xi32>
      %33 = arith.andi %30, %32 : vector<1x128xi1>
      %34 = vector.shape_cast %33 : vector<1x128xi1> to vector<1x128xi1>
      %35 = vector.broadcast %34 : vector<1x128xi1> to vector<32x128xi1>
      %36 = arith.select %35, %28, %10 : vector<32x128xi1>, vector<32x128xf32>
      %c1_i32 = arith.constant 1 : i32
      %37 = tpu.dynamic_rotate %20 by %c1_i32 dim 0 : vector<32x128xf32>, i32 -> vector<32x128xf32>
      %c1_i32_16 = arith.constant 1 : i32
      %38 = vector.broadcast %c1_i32_16 : i32 to vector<32x1xi32>
      %39 = arith.cmpi sge, %14, %38 : vector<32x1xi32>
      %cst_17 = arith.constant 0.000000e+00 : f32
      %40 = vector.shape_cast %39 : vector<32x1xi1> to vector<32x1xi1>
      %41 = vector.broadcast %40 : vector<32x1xi1> to vector<32x128xi1>
      %42 = vector.broadcast %cst_17 : f32 to vector<32x128xf32>
      %43 = arith.select %41, %37, %42 : vector<32x128xi1>, vector<32x128xf32>
      %c32_i32 = arith.constant 32 : i32
      %44 = vector.broadcast %c32_i32 : i32 to vector<1x128xi32>
      %45 = arith.cmpi sge, %21, %44 : vector<1x128xi32>
      %c64_i32_18 = arith.constant 64 : i32
      %46 = vector.broadcast %c64_i32_18 : i32 to vector<1x128xi32>
      %47 = arith.cmpi slt, %21, %46 : vector<1x128xi32>
      %48 = arith.andi %45, %47 : vector<1x128xi1>
      %49 = vector.shape_cast %48 : vector<1x128xi1> to vector<1x128xi1>
      %50 = vector.broadcast %49 : vector<1x128xi1> to vector<32x128xi1>
      %51 = arith.select %50, %43, %36 : vector<32x128xi1>, vector<32x128xf32>
      %c2_i32 = arith.constant 2 : i32
      %52 = tpu.dynamic_rotate %20 by %c2_i32 dim 0 : vector<32x128xf32>, i32 -> vector<32x128xf32>
      %c2_i32_19 = arith.constant 2 : i32
      %53 = vector.broadcast %c2_i32_19 : i32 to vector<32x1xi32>
      %54 = arith.cmpi sge, %14, %53 : vector<32x1xi32>
      %cst_20 = arith.constant 0.000000e+00 : f32
      %55 = vector.shape_cast %54 : vector<32x1xi1> to vector<32x1xi1>
      %56 = vector.broadcast %55 : vector<32x1xi1> to vector<32x128xi1>
      %57 = vector.broadcast %cst_20 : f32 to vector<32x128xf32>
      %58 = arith.select %56, %52, %57 : vector<32x128xi1>, vector<32x128xf32>
      %c96_i32_21 = arith.constant 96 : i32
      %59 = vector.broadcast %c96_i32_21 : i32 to vector<1x128xi32>
      %60 = arith.cmpi sge, %21, %59 : vector<1x128xi32>
      %c128_i32 = arith.constant 128 : i32
      %61 = vector.broadcast %c128_i32 : i32 to vector<1x128xi32>
      %62 = arith.cmpi slt, %21, %61 : vector<1x128xi32>
      %63 = arith.andi %60, %62 : vector<1x128xi1>
      %64 = vector.shape_cast %63 : vector<1x128xi1> to vector<1x128xi1>
      %65 = vector.broadcast %64 : vector<1x128xi1> to vector<32x128xi1>
      %66 = arith.select %65, %58, %51 : vector<32x128xi1>, vector<32x128xf32>
      %c0_22 = arith.constant 0 : index
      %c0_23 = arith.constant 0 : index
      %67 = vector.load %arg7[%c0_22, %c0_23] : memref<32x128xf32, #tpu.memory_space<vmem>>, vector<32x128xf32>
      tpu.vector_store %arg7[%c0_22, %c0_23], %66 {strides = array<i32>} : memref<32x128xf32, #tpu.memory_space<vmem>>, vector<32x128xf32>,
    } else {
    }
    %c0 = arith.constant 0 : index
    %c0_1 = arith.constant 0 : index
    %3 = vector.load %arg7[%c0, %c0_1] : memref<32x128xf32, #tpu.memory_space<vmem>>, vector<32x128xf32>
    %c0_2 = arith.constant 0 : index
    %c0_3 = arith.constant 0 : index
    %4 = vector.load %arg4[%c0_2, %c0_3] : memref<128x128xf32, #tpu.memory_space<vmem>>, vector<128x128xf32>
    %cst = arith.constant dense<0.000000e+00> : vector<32x128xf32>
    %5 = tpu.matmul %3, %4, %cst {dimension_numbers = #tpu.dot_dimension_numbers<[1], [0], [0], [1], [0, 0, 1, 1], [], []>} : vector<32x128xf32>, vector<128x128xf32>, vector<32x128xf32> -> vector<32x128xf32>
    %c0_4 = arith.constant 0 : index
    %c0_5 = arith.constant 0 : index
    %6 = vector.load %arg5[%c0_4, %c0_5] : memref<1x128xf32, #tpu.memory_space<vmem>>, vector<1x128xf32>
    %7 = vector.broadcast %6 : vector<1x128xf32> to vector<32x128xf32>
    %8 = arith.addf %5, %7 : vector<32x128xf32>
    %c0_6 = arith.constant 0 : index
    %c0_7 = arith.constant 0 : index
    %9 = vector.load %arg6[%c0_6, %c0_7] : memref<32x128xf32, #tpu.memory_space<vmem>>, vector<32x128xf32>
    tpu.vector_store %arg6[%c0_6, %c0_7], %8 {strides = array<i32>} : memref<32x128xf32, #tpu.memory_space<vmem>>, vector<32x128xf32>,
    return
  }
  func.func @transform_0(%arg0: i32, %arg1: i32) -> (i32, i32) {
    %c0_i32 = arith.constant 0 : i32
    %c0_i32_0 = arith.constant 0 : i32
    return %arg0, %c0_i32 : i32, i32
  }
  func.func @transform_1(%arg0: i32, %arg1: i32) -> (i32, i32) {
    %c0_i32 = arith.constant 0 : i32
    %c0_i32_0 = arith.constant 0 : i32
    return %arg0, %c0_i32 : i32, i32
  }
  func.func @transform_2(%arg0: i32, %arg1: i32) -> (i32, i32) {
    %c0_i32 = arith.constant 0 : i32
    %c0_i32_0 = arith.constant 0 : i32
    return %c0_i32, %arg1 : i32, i32
  }
  func.func @transform_3(%arg0: i32, %arg1: i32) -> (i32, i32) {
    %c0_i32 = arith.constant 0 : i32
    %c0_i32_0 = arith.constant 0 : i32
    return %c0_i32, %arg1 : i32, i32
  }
  func.func @transform_4(%arg0: i32, %arg1: i32) -> (i32, i32) {
    %c0_i32 = arith.constant 0 : i32
    return %arg0, %arg1 : i32, i32
  }
}

</mosaic_0001>

<llo_original>
// kernel: tpu_custom_call.1
$region0: #{tpu_custom_call.1}
  #allocation0 [shape = 'u32[]', space=smem, size = 0x4, offset = 0x4, fixed_abs, tag = 'smem constant byte address 0x4 - core index']
  #allocation1 [shape = 'u32[144,128]{1,0:T(1,128)}', space=vmem, size = 0x12000, scoped, tag = 'internal scratch']
  #allocation2 [shape = 'f32[32,128]{1,0:T(8,128)}', space=vmem, size = 0x4000, scoped, tag = 'scratch operand']
  %s0 = inlined_call_operand.vmem [shape: f32[32,128], index: 0, kind: input, shape index: {}]
  %s1 = inlined_call_operand.vmem [shape: f32[32,1], index: 1, kind: input, shape index: {}]
  %s2 = inlined_call_operand.hbm [shape: f32[128,128], index: 2, kind: input, shape index: {}]
  %s3 = inlined_call_operand.vmem [shape: f32[1,128], index: 3, kind: input, shape index: {}]
  %s4 = inlined_call_operand.hbm [shape: f32[32,128], index: 4, kind: output, shape index: {}]
  %s5 = sld [smem:[#allocation0]]
  $region34: #{tpu_custom_call.1} parent=0
    _
  %s7 = ssub.s32 1, %s5
  %s8 = scalar_select 0, %s7, %s5
  $region1: #{tpu_custom_call.1} parent=0
    #allocation3 [shape = 'u8[65536]{0}', space=vmem, size = 0x10000, scoped, tag = 'input window, operand 2, single buffered']
    #allocation4 [shape = 's32[1]{0}', space=sflag, size = 0x4, scoped, tag = 'scoped memory for tpu_custom_call.1']
    #allocation5 [shape = 's32[1]{0}', space=sflag, size = 0x4, scoped, tag = 'scoped memory for tpu_custom_call.1']
    #allocation6 [shape = 'u8[16384]{0}', space=vmem, size = 0x4000, scoped, tag = 'output window, operand 0, single buffered']
    %9 = vsyncpa [#allocation4], 0
    %10 = vsyncpa [#allocation5], 0
    // Predicated region
    $region2: #{tpu_custom_call.1} parent=1 // pred_check
      _
    $region3: #{tpu_custom_call.1} parent=1 // pred_check_branch
      %12 = sbr.rel (0) target = $region5
    $region4: #{tpu_custom_call.1} parent=1 // pred_region
      _
    $region5: #{tpu_custom_call.1} parent=1 // pred_fallthru
      _
    // Predicated region
    $region6: #{tpu_custom_call.1} parent=1 // pred_check
      _
    $region7: #{tpu_custom_call.1} parent=1 // pred_check_branch
      %14 = sbr.rel (0) target = $region9
    $region8: #{tpu_custom_call.1} parent=1 // pred_region
      _
    $region9: #{tpu_custom_call.1} parent=1 // pred_fallthru
      _
    // Predicated region
    $region10: #{tpu_custom_call.1} parent=1 // pred_check
      _
    $region11: #{tpu_custom_call.1} parent=1 // pred_check_branch
      %16 = sbr.rel (0) target = $region13
    $region12: #{tpu_custom_call.1} parent=1 // pred_region
      %s18 = ssub.s32 2048, 2048
      %19 = vsyncadd [#allocation4], %s18
      %s20 = sshll.u32 [#allocation3], 4
      %s21 = int_to_ptr.vmem [resolvable:$true] %s20
      %26 = dma.hbm_to_vmem [thread:$0]  %s2, 2048, %s21, [#allocation4], 128, 128, 8
    $region13: #{tpu_custom_call.1} parent=1 // pred_fallthru
      _
    // Predicated region
    $region14: #{tpu_custom_call.1} parent=1 // pred_check
      _
    $region15: #{tpu_custom_call.1} parent=1 // pred_check_branch
      %28 = sbr.rel (0) target = $region17
    $region16: #{tpu_custom_call.1} parent=1 // pred_region
      _
    $region17: #{tpu_custom_call.1} parent=1 // pred_fallthru
      _
    // Predicated region
    $region18: #{tpu_custom_call.1} parent=1 // pred_check
      _
    $region19: #{tpu_custom_call.1} parent=1 // pred_check_branch
      %30 = sbr.rel (0) target = $region21
    $region20: #{tpu_custom_call.1} parent=1 // pred_region
      %31 = dma.done [#allocation4], 2048
    $region21: #{tpu_custom_call.1} parent=1 // pred_fallthru
      _
    %p32 = scmp.eq.s32.totalorder 0, 0
    // Predicated region
    $region22: #{tpu_custom_call.1} parent=1 // pred_check
      %p33 = pneg %p32
    $region23: #{tpu_custom_call.1} parent=1 // pred_check_branch
      %35 = sbr.rel (%p33) target = $region25
    $region24: #{tpu_custom_call.1} parent=1 // pred_region
      %v36 = vld [vmem:[%s0] sm:$0xff]
      %v37 = vld [vmem:[%s0 + $0x8] sm:$0xff]
      %v38 = vld [vmem:[%s0 + $0x10] sm:$0xff]
      %v39 = vld [vmem:[%s0 + $0x18] sm:$0xff]
      %v40 = vld [vmem:[%s1] sm:$0xff]
      %v41 = vld [vmem:[%s1 + $0x8] sm:$0xff]
      %v42 = vld [vmem:[%s1 + $0x10] sm:$0xff]
      %v43 = vld [vmem:[%s1 + $0x18] sm:$0xff]
      %v44 = vlaneseq
      %v45 = vshrl.u32 %v44, 7
      %v46 = vadd.s32 %v45, 8
      %v47 = vadd.s32 %v45, 16
      %v48 = vadd.s32 %v45, 24
      %v49 = vand.u32 %v45, 15
      %v50 = vand.u32 %v46, 15
      %v51 = vand.u32 %v47, 15
      %v52 = vand.u32 %v48, 15
      %vm53 = vcmp.ne.f32.partialorder %v40, 0.0
      %vm54 = vcmp.ne.f32.partialorder %v41, 0.0
      %vm55 = vcmp.ne.f32.partialorder %v42, 0.0
      %vm56 = vcmp.ne.f32.partialorder %v43, 0.0
      %v57 = vsel %vm53, 1, 0
      %v58 = vsel %vm54, 1, 0
      %v59 = vsel %vm55, 1, 0
      %v60 = vsel %vm56, 1, 0
      %61 = vset.pattern.permute.xlu0 0
      %62 = vperm.xlu0 %61, %v57
      %v63 = vpop.permute.xlu0 %62
      %64 = vset.pattern.permute.xlu0 0
      %65 = vperm.xlu0 %64, %v58
      %v66 = vpop.permute.xlu0 %65
      %67 = vset.pattern.permute.xlu0 0
      %68 = vperm.xlu0 %67, %v59
      %v69 = vpop.permute.xlu0 %68
      %70 = vset.pattern.permute.xlu0 0
      %71 = vperm.xlu0 %70, %v60
      %v72 = vpop.permute.xlu0 %71
      %vm73 = vcmp.eq.s32.totalorder %v63, 1
      %vm74 = vcmp.eq.s32.totalorder %v66, 1
      %vm75 = vcmp.eq.s32.totalorder %v69, 1
      %vm76 = vcmp.eq.s32.totalorder %v72, 1
      %v77 = vsel %vm73, %v36, 0.0
      %v78 = vsel %vm74, %v37, 0.0
      %v79 = vsel %vm75, %v38, 0.0
      %v80 = vsel %vm76, %v39, 0.0
      %v81 = vlaneseq
      %v82 = vand.u32 %v81, 127
      %v83 = vrot.slane %v77, 1
      %v84 = vrot.slane %v78, 1
      %v85 = vrot.slane %v79, 1
      %v86 = vrot.slane %v80, 1
      %vm87 = vcmp.lt.s32.totalorder %v45, 7
      %v88 = vsel %vm87, %v85, %v86
      %v89 = vsel %vm87, %v84, %v85
      %v90 = vsel %vm87, %v83, %v84
      %v91 = vsel %vm87, %v86, %v83
      %vm92 = vcmp.lt.s32.totalorder %v49, 15
      %vm93 = vcmp.lt.s32.totalorder %v50, 15
      %vm94 = vcmp.lt.s32.totalorder %v51, 15
      %vm95 = vcmp.lt.s32.totalorder %v52, 15
      %v96 = vsel %vm92, 1, 0
      %v97 = vsel %vm93, 1, 0
      %v98 = vsel %vm94, 1, 0
      %v99 = vsel %vm95, 1, 0
      %vm100 = vcmp.eq.s32.totalorder %v96, 1
      %vm101 = vcmp.eq.s32.totalorder %v97, 1
      %vm102 = vcmp.eq.s32.totalorder %v98, 1
      %vm103 = vcmp.eq.s32.totalorder %v99, 1
      %v104 = vsel %vm100, %v90, 0.0
      %v105 = vsel %vm101, %v89, 0.0
      %v106 = vsel %vm102, %v88, 0.0
      %v107 = vsel %vm103, %v91, 0.0
      %vm108 = vcmp.ge.s32.totalorder %v82, 64
      %vm109 = vcmp.lt.s32.totalorder %v82, 96
      %vm110 = vmand %vm108, %vm109
      %v111 = vsel %vm110, 1, 0
      %vm112 = vcmp.eq.s32.totalorder %v111, 1
      %v113 = vsel %vm112, %v104, %v36
      %v114 = vsel %vm112, %v105, %v37
      %v115 = vsel %vm112, %v106, %v38
      %v116 = vsel %vm112, %v107, %v39
      %v117 = vrot.slane %v77, 7
      %v118 = vrot.slane %v78, 7
      %v119 = vrot.slane %v79, 7
      %v120 = vrot.slane %v80, 7
      %vm121 = vcmp.lt.s32.totalorder %v45, 1
      %v122 = vsel %vm121, %v119, %v120
      %v123 = vsel %vm121, %v118, %v119
      %v124 = vsel %vm121, %v117, %v118
      %v125 = vsel %vm121, %v120, %v117
      %vm126 = vcmp.ge.s32.totalorder %v49, 1
      %vm127 = vcmp.ge.s32.totalorder %v50, 1
      %vm128 = vcmp.ge.s32.totalorder %v51, 1
      %vm129 = vcmp.ge.s32.totalorder %v52, 1
      %v130 = vsel %vm126, 1, 0
      %v131 = vsel %vm127, 1, 0
      %v132 = vsel %vm128, 1, 0
      %v133 = vsel %vm129, 1, 0
      %vm134 = vcmp.eq.s32.totalorder %v130, 1
      %vm135 = vcmp.eq.s32.totalorder %v131, 1
      %vm136 = vcmp.eq.s32.totalorder %v132, 1
      %vm137 = vcmp.eq.s32.totalorder %v133, 1
      %v138 = vsel %vm134, %v125, 0.0
      %v139 = vsel %vm135, %v124, 0.0
      %v140 = vsel %vm136, %v123, 0.0
      %v141 = vsel %vm137, %v122, 0.0
      %vm142 = vcmp.ge.s32.totalorder %v82, 32
      %vm143 = vcmp.lt.s32.totalorder %v82, 64
      %vm144 = vmand %vm142, %vm143
      %v145 = vsel %vm144, 1, 0
      %vm146 = vcmp.eq.s32.totalorder %v145, 1
      %v147 = vsel %vm146, %v138, %v113
      %v148 = vsel %vm146, %v139, %v114
      %v149 = vsel %vm146, %v140, %v115
      %v150 = vsel %vm146, %v141, %v116
      %v151 = vrot.slane %v77, 6
      %v152 = vrot.slane %v78, 6
      %v153 = vrot.slane %v79, 6
      %v154 = vrot.slane %v80, 6
      %vm155 = vcmp.lt.s32.totalorder %v45, 2
      %v156 = vsel %vm155, %v153, %v154
      %v157 = vsel %vm155, %v152, %v153
      %v158 = vsel %vm155, %v151, %v152
      %v159 = vsel %vm155, %v154, %v151
      %vm160 = vcmp.ge.s32.totalorder %v49, 2
      %vm161 = vcmp.ge.s32.totalorder %v50, 2
      %vm162 = vcmp.ge.s32.totalorder %v51, 2
      %vm163 = vcmp.ge.s32.totalorder %v52, 2
      %v164 = vsel %vm160, 1, 0
      %v165 = vsel %vm161, 1, 0
      %v166 = vsel %vm162, 1, 0
      %v167 = vsel %vm163, 1, 0
      %vm168 = vcmp.eq.s32.totalorder %v164, 1
      %vm169 = vcmp.eq.s32.totalorder %v165, 1
      %vm170 = vcmp.eq.s32.totalorder %v166, 1
      %vm171 = vcmp.eq.s32.totalorder %v167, 1
      %v172 = vsel %vm168, %v159, 0.0
      %v173 = vsel %vm169, %v158, 0.0
      %v174 = vsel %vm170, %v157, 0.0
      %v175 = vsel %vm171, %v156, 0.0
      %vm176 = vcmp.ge.s32.totalorder %v82, 96
      %vm177 = vcmp.lt.s32.totalorder %v82, 128
      %vm178 = vmand %vm176, %vm177
      %v179 = vsel %vm178, 1, 0
      %vm180 = vcmp.eq.s32.totalorder %v179, 1
      %v181 = vsel %vm180, %v172, %v147
      %v182 = vsel %vm180, %v173, %v148
      %v183 = vsel %vm180, %v174, %v149
      %v184 = vsel %vm180, %v175, %v150
      %185 = vst [vmem:[#allocation2] sm:$0xff] %v181
      %186 = vst [vmem:[#allocation2 + $0x8] sm:$0xff] %v182
      %187 = vst [vmem:[#allocation2 + $0x10] sm:$0xff] %v183
      %188 = vst [vmem:[#allocation2 + $0x18] sm:$0xff] %v184
    $region25: #{tpu_custom_call.1} parent=1 // pred_fallthru
      _
    %v189 = vld [vmem:[#allocation2] sm:$0xff]
    %v190 = vld [vmem:[#allocation2 + $0x8] sm:$0xff]
    %v191 = vld [vmem:[#allocation2 + $0x10] sm:$0xff]
    %v192 = vld [vmem:[#allocation2 + $0x18] sm:$0xff]
    %v193 = vld [vmem:[#allocation3] sm:$0xff]
    %v194 = vld [vmem:[#allocation3 + $0x8] sm:$0xff]
    %v195 = vld [vmem:[#allocation3 + $0x10] sm:$0xff]
    %v196 = vld [vmem:[#allocation3 + $0x18] sm:$0xff]
    %v197 = vld [vmem:[#allocation3 + $0x20] sm:$0xff]
    %v198 = vld [vmem:[#allocation3 + $0x28] sm:$0xff]
    %v199 = vld [vmem:[#allocation3 + $0x30] sm:$0xff]
    %v200 = vld [vmem:[#allocation3 + $0x38] sm:$0xff]
    %v201 = vld [vmem:[#allocation3 + $0x40] sm:$0xff]
    %v202 = vld [vmem:[#allocation3 + $0x48] sm:$0xff]
    %v203 = vld [vmem:[#allocation3 + $0x50] sm:$0xff]
    %v204 = vld [vmem:[#allocation3 + $0x58] sm:$0xff]
    %v205 = vld [vmem:[#allocation3 + $0x60] sm:$0xff]
    %v206 = vld [vmem:[#allocation3 + $0x68] sm:$0xff]
    %v207 = vld [vmem:[#allocation3 + $0x70] sm:$0xff]
    %v208 = vld [vmem:[#allocation3 + $0x78] sm:$0xff]
    %v209 = vld [vmem:[%s3] sm:$0x1]
    %v211 = vlaneseq
    %v212 = vshrl.u32 %v211, 7
    %v213 = vsub.s32 0, %v212
    %v214 = vrot.slane %v209, %v213
    %216 = vmatprep.subr.mxu0 0.0
    %217 = vmatpush1.msra.mxu0 %v208
    %218 = vmatprep.subr.mxu0 0.0
    %219 = vmatpush1.msra.mxu0 %v207
    %220 = vmatprep.subr.mxu0 0.0
    %221 = vmatpush1.msra.mxu0 %v206
    %222 = vmatprep.subr.mxu0 0.0
    %223 = vmatpush1.msra.mxu0 %v205
    %224 = vmatprep.subr.mxu0 0.0
    %225 = vmatpush1.msra.mxu0 %v204
    %226 = vmatprep.subr.mxu0 0.0
    %227 = vmatpush1.msra.mxu0 %v203
    %228 = vmatprep.subr.mxu0 0.0
    %229 = vmatpush1.msra.mxu0 %v202
    %230 = vmatprep.subr.mxu0 0.0
    %231 = vmatpush1.msra.mxu0 %v201
    %232 = vmatprep.subr.mxu0 0.0
    %233 = vmatpush1.msra.mxu0 %v200
    %234 = vmatprep.subr.mxu0 0.0
    %235 = vmatpush1.msra.mxu0 %v199
    %236 = vmatprep.subr.mxu0 0.0
    %237 = vmatpush1.msra.mxu0 %v198
    %238 = vmatprep.subr.mxu0 0.0
    %239 = vmatpush1.msra.mxu0 %v197
    %240 = vmatprep.subr.mxu0 0.0
    %241 = vmatpush1.msra.mxu0 %v196
    %242 = vmatprep.subr.mxu0 0.0
    %243 = vmatpush1.msra.mxu0 %v195
    %244 = vmatprep.subr.mxu0 0.0
    %245 = vmatpush1.msra.mxu0 %v194
    %246 = vmatprep.subr.mxu0 0.0
    %247 = vmatpush1.msra.mxu0 %v193
    %248 = vmatprep.subr.mxu0 0.0
    %249 = vmatpush2.msra.mxu0 0.0
    %250 = vmatprep.subr.mxu0 0.0
    %251 = vmatpush2.msra.mxu0 0.0
    %252 = vmatprep.subr.mxu0 0.0
    %253 = vmatpush2.msra.mxu0 0.0
    %254 = vmatprep.subr.mxu0 0.0
    %255 = vmatpush2.msra.mxu0 0.0
    %256 = vmatprep.subr.mxu0 0.0
    %257 = vmatpush2.msra.mxu0 0.0
    %258 = vmatprep.subr.mxu0 0.0
    %259 = vmatpush2.msra.mxu0 0.0
    %260 = vmatprep.subr.mxu0 0.0
    %261 = vmatpush2.msra.mxu0 0.0
    %262 = vmatprep.subr.mxu0 0.0
    %263 = vmatpush2.msra.mxu0 0.0
    %264 = vmatprep.subr.mxu0 0.0
    %265 = vmatpush2.msra.mxu0 0.0
    %266 = vmatprep.subr.mxu0 0.0
    %267 = vmatpush2.msra.mxu0 0.0
    %268 = vmatprep.subr.mxu0 0.0
    %269 = vmatpush2.msra.mxu0 0.0
    %270 = vmatprep.subr.mxu0 0.0
    %271 = vmatpush2.msra.mxu0 0.0
    %272 = vmatprep.subr.mxu0 0.0
    %273 = vmatpush2.msra.mxu0 0.0
    %274 = vmatprep.subr.mxu0 0.0
    %275 = vmatpush2.msra.mxu0 0.0
    %276 = vmatprep.subr.mxu0 0.0
    %277 = vmatpush2.msra.mxu0 0.0
    %278 = vmatprep.subr.mxu0 0.0
    %279 = vmatpush2.msra.mxu0 0.0
    %280 = vmatprep.mubr.f32.mxu0 0.0
    %281 = vmatmul.mubr.f32.gmra.mxu0 %v189
    %v282 = vpop.f32.mrf.mxu0
    %v283 = vadd.f32 %v214, %v282
    %v284 = vpop.f32.mrf.mxu0
    %285 = vmatprep.mubr.f32.mxu0 0.0
    %286 = vmatmul.mubr.f32.gmra.mxu0 %v190
    %v287 = vpop.f32.mrf.mxu0
    %v288 = vadd.f32 %v214, %v287
    %v289 = vpop.f32.mrf.mxu0
    %290 = vmatprep.mubr.f32.mxu0 0.0
    %291 = vmatmul.mubr.f32.gmra.mxu0 %v191
    %v292 = vpop.f32.mrf.mxu0
    %v293 = vadd.f32 %v214, %v292
    %v294 = vpop.f32.mrf.mxu0
    %295 = vmatprep.mubr.f32.mxu0 0.0
    %296 = vmatmul.mubr.f32.gmra.mxu0 %v192
    %v297 = vpop.f32.mrf.mxu0
    %v298 = vadd.f32 %v214, %v297
    %v299 = vpop.f32.mrf.mxu0
    %300 = vdwg.mxu0
    %301 = vst [vmem:[#allocation6] sm:$0xff] %v283
    %302 = vst [vmem:[#allocation6 + $0x8] sm:$0xff] %v288
    %303 = vst [vmem:[#allocation6 + $0x10] sm:$0xff] %v293
    %304 = vst [vmem:[#allocation6 + $0x18] sm:$0xff] %v298
    // Predicated region
    $region26: #{tpu_custom_call.1} parent=1 // pred_check
      _
    $region27: #{tpu_custom_call.1} parent=1 // pred_check_branch
      %306 = sbr.rel (0) target = $region29
    $region28: #{tpu_custom_call.1} parent=1 // pred_region
      %s308 = ssub.s32 512, 512
      %309 = vsyncadd [#allocation5], %s308
      %s310 = sshll.u32 [#allocation6], 4
      %s311 = int_to_ptr.vmem [resolvable:$true] %s310
      %316 = dma.vmem_to_hbm [thread:$0]  %s311, 512, %s4, [#allocation5], 128, 128, 8
    $region29: #{tpu_custom_call.1} parent=1 // pred_fallthru
      _
    // Predicated region
    $region30: #{tpu_custom_call.1} parent=1 // pred_check
      _
    $region31: #{tpu_custom_call.1} parent=1 // pred_check_branch
      %318 = sbr.rel (0) target = $region33
    $region32: #{tpu_custom_call.1} parent=1 // pred_region
      %319 = dma.done [#allocation5], 512
    $region33: #{tpu_custom_call.1} parent=1 // pred_fallthru
      _
    %320 = vsyncpa [#allocation4], 1
    %321 = vsyncpa [#allocation5], 1

</llo_original>
